<compile_context>
chip_gen: v7x
topology: tpu7x:2x2x1
jax: 0.10.0
libtpu: 0.0.40
codegen_flags: <defaults>
</compile_context>

<pallas_src>
import math

import jax
import jax.numpy as jnp
from jax.experimental import pallas as pl
from jax.experimental.pallas import tpu as pltpu

XDIM = 2
HDIM = 8
UDIM = 1
STD = 1.0  # s.std = 1 in the PyTorch module

_LOGP_CONST = -math.log(STD) - 0.5 * math.log(2.0 * math.pi)


def u_t_kernel(w1_ref, b1_ref, w2_ref, b2_ref, x_ref, eps_ref, u_ref, logp_ref):
    """Fused Linear->ReLU->Linear->Tanh + rsample + log_prob, batch on lanes.

    x_ref:   [XDIM, Bt]   (VMEM tile)
    eps_ref: [UDIM, Bt]   (VMEM tile)
    w1_ref:  [XDIM*HDIM]  (SMEM, row-major flatten of [XDIM, HDIM])
    b1_ref:  [HDIM]       (SMEM)
    w2_ref:  [HDIM]       (SMEM)
    b2_ref:  [UDIM]       (SMEM)
    """
    x0 = x_ref[0:1, :]          # [1, Bt]
    x1 = x_ref[1:2, :]          # [1, Bt]
    eps = eps_ref[...]          # [1, Bt]

    # mu = tanh( W2 @ relu(W1 @ x + b1) + b2 ), unrolled term-by-term on the VPU.
    acc = jnp.zeros_like(x0) + b2_ref[0]
    for j in range(HDIM):
        h_j = jnp.maximum(w1_ref[j] * x0 + w1_ref[HDIM + j] * x1 + b1_ref[j], 0.0)
        acc = acc + w2_ref[j] * h_j
    mu = jnp.tanh(acc)          # only EUP op; rides a free slot

    # Normal(mu, STD).rsample():  u = mu + STD * eps
    u_ref[...] = mu + STD * eps
    # Normal(mu, STD).log_prob(u): z = (u - mu)/STD == eps exactly, so logp is a
    # pure function of eps (log(STD) and 0.5*log(2*pi) folded at trace time).
    logp_ref[...] = -0.5 * (eps * eps) + _LOGP_CONST


def u_t_forward(x, params, eps, *, b_tile=32768):
    """Runs the Pallas kernel. x: [B, XDIM], eps: [B, UDIM]. Returns (u, logp) as [B, UDIM] f32."""
    B = x.shape[0]
    x_t = jnp.asarray(x, jnp.float32).T                        # [XDIM, B]
    eps_t = jnp.asarray(eps, jnp.float32).reshape(B, UDIM).T   # [UDIM, B]

    # Pad batch up to a multiple of the lane-aligned tile (>= 128).
    b_pad = ((B + 127) // 128) * 128
    tile = min(b_tile, b_pad)
    grid = pl.cdiv(b_pad, tile)
    b_pad = grid * tile
    if b_pad != B:
        x_t = jnp.pad(x_t, ((0, 0), (0, b_pad - B)))
        eps_t = jnp.pad(eps_t, ((0, 0), (0, b_pad - B)))

    # Tiny weights/biases flattened to 1-D (minimal SMEM padding), read as scalars in-kernel.
    w1 = params["w1"].reshape(-1).astype(jnp.float32)   # [XDIM*HDIM]
    b1 = params["b1"].reshape(-1).astype(jnp.float32)   # [HDIM]
    w2 = params["w2"].reshape(-1).astype(jnp.float32)   # [HDIM]
    b2 = params["b2"].reshape(-1).astype(jnp.float32)   # [UDIM]

    smem = pl.BlockSpec(memory_space=pltpu.MemorySpace.SMEM)
    u_t2, logp_t2 = pl.pallas_call(
        u_t_kernel,
        out_shape=(jax.ShapeDtypeStruct((UDIM, b_pad), jnp.float32),
                   jax.ShapeDtypeStruct((UDIM, b_pad), jnp.float32)),
        grid=(grid,),
        in_specs=[smem, smem, smem, smem,
                  pl.BlockSpec((XDIM, tile), lambda i: (0, i)),
                  pl.BlockSpec((UDIM, tile), lambda i: (0, i))],
        out_specs=(pl.BlockSpec((UDIM, tile), lambda i: (0, i)),
                   pl.BlockSpec((UDIM, tile), lambda i: (0, i))),
        compiler_params=pltpu.CompilerParams(
            dimension_semantics=("parallel",)),
    )(w1, b1, w2, b2, x_t, eps_t)

    u = u_t2[:, :B].T        # [B, UDIM]
    logp = logp_t2[:, :B].T  # [B, UDIM]
    return u, logp


def init_params(key):
    """Deterministic init mirroring nn.Linear defaults (uniform(-1/sqrt(fan_in), ...))."""
    k1, k2, k3, k4 = jax.random.split(key, 4)
    bound1 = 1.0 / math.sqrt(XDIM)
    bound2 = 1.0 / math.sqrt(HDIM)
    return {
        "w1": jax.random.uniform(k1, (XDIM, HDIM), jnp.float32, -bound1, bound1),
        "b1": jax.random.uniform(k2, (1, HDIM), jnp.float32, -bound1, bound1),
        "w2": jax.random.uniform(k3, (HDIM, UDIM), jnp.float32, -bound2, bound2),
        "b2": jax.random.uniform(k4, (1, UDIM), jnp.float32, -bound2, bound2),
    }


def reference_forward(x, params, eps):
    """Pure-JAX reference for correctness check (same math as the PyTorch module)."""
    h = jnp.maximum(x @ params["w1"] + params["b1"], 0.0)
    mu = jnp.tanh(h @ params["w2"] + params["b2"])
    u = mu + STD * eps
    z = (u - mu) / STD
    logp = -0.5 * z * z - math.log(STD) - 0.5 * math.log(2.0 * math.pi)
    return u, logp


if __name__ == "__main__":
    key = jax.random.PRNGKey(0)
    kp, kx, ke = jax.random.split(key, 3)

    B = 8
    params = init_params(kp)
    x = jax.random.normal(kx, (B, XDIM), jnp.float32)
    eps = jax.random.normal(ke, (B, UDIM), jnp.float32)  # noise for rsample()

    u, logp = u_t_forward(x, params, eps)
    jax.block_until_ready((u, logp))

    u_ref, logp_ref = reference_forward(x, params, eps)
    assert u.shape == (B, UDIM) and logp.shape == (B, UDIM)
    assert jnp.allclose(u, u_ref, atol=1e-4), "u mismatch vs reference"
    assert jnp.allclose(logp, logp_ref, atol=1e-4), "logp mismatch vs reference"

    print("KERNEL_OK")
</pallas_src>

<mosaic_0001>
module attributes {stable_mosaic.version = 11 : i64} {
  func.func @u_t_kernel(%arg0: i32, %arg1: memref<16xf32, #tpu.memory_space<smem>>, %arg2: memref<8xf32, #tpu.memory_space<smem>>, %arg3: memref<8xf32, #tpu.memory_space<smem>>, %arg4: memref<1xf32, #tpu.memory_space<smem>>, %arg5: memref<2x128xf32, #tpu.memory_space<vmem>>, %arg6: memref<1x128xf32, #tpu.memory_space<vmem>>, %arg7: memref<1x128xf32, #tpu.memory_space<vmem>>, %arg8: memref<1x128xf32, #tpu.memory_space<vmem>>) attributes {dimension_semantics = [#tpu.dimension_semantics<parallel>], iteration_bounds = array<i64: 1>, scalar_prefetch = 0 : i64, scratch_operands = 0 : i64, tpu.core_type = #tpu.core_type<tc>, window_params = [{transform_indices = @transform_0, window_bounds = array<i64: 16>}, {transform_indices = @transform_1, window_bounds = array<i64: 8>}, {transform_indices = @transform_2, window_bounds = array<i64: 8>}, {transform_indices = @transform_3, window_bounds = array<i64: 1>}, {transform_indices = @transform_4, window_bounds = array<i64: 2, 128>}, {transform_indices = @transform_5, window_bounds = array<i64: 1, 128>}, {transform_indices = @transform_6, window_bounds = array<i64: 1, 128>}, {transform_indices = @transform_7, window_bounds = array<i64: 1, 128>}]} {
    %c0 = arith.constant 0 : index
    %c0_0 = arith.constant 0 : index
    %0 = vector.load %arg5[%c0, %c0_0] : memref<2x128xf32, #tpu.memory_space<vmem>>, vector<1x128xf32>
    %c1 = arith.constant 1 : index
    %c0_1 = arith.constant 0 : index
    %1 = vector.load %arg5[%c1, %c0_1] : memref<2x128xf32, #tpu.memory_space<vmem>>, vector<1x128xf32>
    %c0_2 = arith.constant 0 : index
    %c0_3 = arith.constant 0 : index
    %2 = vector.load %arg6[%c0_2, %c0_3] : memref<1x128xf32, #tpu.memory_space<vmem>>, vector<1x128xf32>
    %cst = arith.constant 0.000000e+00 : f32
    %3 = vector.broadcast %cst : f32 to vector<1x128xf32>
    %c0_4 = arith.constant 0 : index
    %4 = memref.load %arg4[%c0_4] : memref<1xf32, #tpu.memory_space<smem>>
    %5 = vector.broadcast %4 : f32 to vector<1x128xf32>
    %6 = arith.addf %3, %5 : vector<1x128xf32>
    %c0_5 = arith.constant 0 : index
    %7 = memref.load %arg1[%c0_5] : memref<16xf32, #tpu.memory_space<smem>>
    %8 = vector.broadcast %7 : f32 to vector<1x128xf32>
    %9 = arith.mulf %8, %0 : vector<1x128xf32>
    %c8 = arith.constant 8 : index
    %10 = memref.load %arg1[%c8] : memref<16xf32, #tpu.memory_space<smem>>
    %11 = vector.broadcast %10 : f32 to vector<1x128xf32>
    %12 = arith.mulf %11, %1 : vector<1x128xf32>
    %13 = arith.addf %9, %12 : vector<1x128xf32>
    %c0_6 = arith.constant 0 : index
    %14 = memref.load %arg2[%c0_6] : memref<8xf32, #tpu.memory_space<smem>>
    %15 = vector.broadcast %14 : f32 to vector<1x128xf32>
    %16 = arith.addf %13, %15 : vector<1x128xf32>
    %cst_7 = arith.constant 0.000000e+00 : f32
    %17 = vector.broadcast %cst_7 : f32 to vector<1x128xf32>
    %18 = arith.maximumf %16, %17 : vector<1x128xf32>
    %c0_8 = arith.constant 0 : index
    %19 = memref.load %arg3[%c0_8] : memref<8xf32, #tpu.memory_space<smem>>
    %20 = vector.broadcast %19 : f32 to vector<1x128xf32>
    %21 = arith.mulf %20, %18 : vector<1x128xf32>
    %22 = arith.addf %6, %21 : vector<1x128xf32>
    %c1_9 = arith.constant 1 : index
    %23 = memref.load %arg1[%c1_9] : memref<16xf32, #tpu.memory_space<smem>>
    %24 = vector.broadcast %23 : f32 to vector<1x128xf32>
    %25 = arith.mulf %24, %0 : vector<1x128xf32>
    %c9 = arith.constant 9 : index
    %26 = memref.load %arg1[%c9] : memref<16xf32, #tpu.memory_space<smem>>
    %27 = vector.broadcast %26 : f32 to vector<1x128xf32>
    %28 = arith.mulf %27, %1 : vector<1x128xf32>
    %29 = arith.addf %25, %28 : vector<1x128xf32>
    %c1_10 = arith.constant 1 : index
    %30 = memref.load %arg2[%c1_10] : memref<8xf32, #tpu.memory_space<smem>>
    %31 = vector.broadcast %30 : f32 to vector<1x128xf32>
    %32 = arith.addf %29, %31 : vector<1x128xf32>
    %cst_11 = arith.constant 0.000000e+00 : f32
    %33 = vector.broadcast %cst_11 : f32 to vector<1x128xf32>
    %34 = arith.maximumf %32, %33 : vector<1x128xf32>
    %c1_12 = arith.constant 1 : index
    %35 = memref.load %arg3[%c1_12] : memref<8xf32, #tpu.memory_space<smem>>
    %36 = vector.broadcast %35 : f32 to vector<1x128xf32>
    %37 = arith.mulf %36, %34 : vector<1x128xf32>
    %38 = arith.addf %22, %37 : vector<1x128xf32>
    %c2 = arith.constant 2 : index
    %39 = memref.load %arg1[%c2] : memref<16xf32, #tpu.memory_space<smem>>
    %40 = vector.broadcast %39 : f32 to vector<1x128xf32>
    %41 = arith.mulf %40, %0 : vector<1x128xf32>
    %c10 = arith.constant 10 : index
    %42 = memref.load %arg1[%c10] : memref<16xf32, #tpu.memory_space<smem>>
    %43 = vector.broadcast %42 : f32 to vector<1x128xf32>
    %44 = arith.mulf %43, %1 : vector<1x128xf32>
    %45 = arith.addf %41, %44 : vector<1x128xf32>
    %c2_13 = arith.constant 2 : index
    %46 = memref.load %arg2[%c2_13] : memref<8xf32, #tpu.memory_space<smem>>
    %47 = vector.broadcast %46 : f32 to vector<1x128xf32>
    %48 = arith.addf %45, %47 : vector<1x128xf32>
    %cst_14 = arith.constant 0.000000e+00 : f32
    %49 = vector.broadcast %cst_14 : f32 to vector<1x128xf32>
    %50 = arith.maximumf %48, %49 : vector<1x128xf32>
    %c2_15 = arith.constant 2 : index
    %51 = memref.load %arg3[%c2_15] : memref<8xf32, #tpu.memory_space<smem>>
    %52 = vector.broadcast %51 : f32 to vector<1x128xf32>
    %53 = arith.mulf %52, %50 : vector<1x128xf32>
    %54 = arith.addf %38, %53 : vector<1x128xf32>
    %c3 = arith.constant 3 : index
    %55 = memref.load %arg1[%c3] : memref<16xf32, #tpu.memory_space<smem>>
    %56 = vector.broadcast %55 : f32 to vector<1x128xf32>
    %57 = arith.mulf %56, %0 : vector<1x128xf32>
    %c11 = arith.constant 11 : index
    %58 = memref.load %arg1[%c11] : memref<16xf32, #tpu.memory_space<smem>>
    %59 = vector.broadcast %58 : f32 to vector<1x128xf32>
    %60 = arith.mulf %59, %1 : vector<1x128xf32>
    %61 = arith.addf %57, %60 : vector<1x128xf32>
    %c3_16 = arith.constant 3 : index
    %62 = memref.load %arg2[%c3_16] : memref<8xf32, #tpu.memory_space<smem>>
    %63 = vector.broadcast %62 : f32 to vector<1x128xf32>
    %64 = arith.addf %61, %63 : vector<1x128xf32>
    %cst_17 = arith.constant 0.000000e+00 : f32
    %65 = vector.broadcast %cst_17 : f32 to vector<1x128xf32>
    %66 = arith.maximumf %64, %65 : vector<1x128xf32>
    %c3_18 = arith.constant 3 : index
    %67 = memref.load %arg3[%c3_18] : memref<8xf32, #tpu.memory_space<smem>>
    %68 = vector.broadcast %67 : f32 to vector<1x128xf32>
    %69 = arith.mulf %68, %66 : vector<1x128xf32>
    %70 = arith.addf %54, %69 : vector<1x128xf32>
    %c4 = arith.constant 4 : index
    %71 = memref.load %arg1[%c4] : memref<16xf32, #tpu.memory_space<smem>>
    %72 = vector.broadcast %71 : f32 to vector<1x128xf32>
    %73 = arith.mulf %72, %0 : vector<1x128xf32>
    %c12 = arith.constant 12 : index
    %74 = memref.load %arg1[%c12] : memref<16xf32, #tpu.memory_space<smem>>
    %75 = vector.broadcast %74 : f32 to vector<1x128xf32>
    %76 = arith.mulf %75, %1 : vector<1x128xf32>
    %77 = arith.addf %73, %76 : vector<1x128xf32>
    %c4_19 = arith.constant 4 : index
    %78 = memref.load %arg2[%c4_19] : memref<8xf32, #tpu.memory_space<smem>>
    %79 = vector.broadcast %78 : f32 to vector<1x128xf32>
    %80 = arith.addf %77, %79 : vector<1x128xf32>
    %cst_20 = arith.constant 0.000000e+00 : f32
    %81 = vector.broadcast %cst_20 : f32 to vector<1x128xf32>
    %82 = arith.maximumf %80, %81 : vector<1x128xf32>
    %c4_21 = arith.constant 4 : index
    %83 = memref.load %arg3[%c4_21] : memref<8xf32, #tpu.memory_space<smem>>
    %84 = vector.broadcast %83 : f32 to vector<1x128xf32>
    %85 = arith.mulf %84, %82 : vector<1x128xf32>
    %86 = arith.addf %70, %85 : vector<1x128xf32>
    %c5 = arith.constant 5 : index
    %87 = memref.load %arg1[%c5] : memref<16xf32, #tpu.memory_space<smem>>
    %88 = vector.broadcast %87 : f32 to vector<1x128xf32>
    %89 = arith.mulf %88, %0 : vector<1x128xf32>
    %c13 = arith.constant 13 : index
    %90 = memref.load %arg1[%c13] : memref<16xf32, #tpu.memory_space<smem>>
    %91 = vector.broadcast %90 : f32 to vector<1x128xf32>
    %92 = arith.mulf %91, %1 : vector<1x128xf32>
    %93 = arith.addf %89, %92 : vector<1x128xf32>
    %c5_22 = arith.constant 5 : index
    %94 = memref.load %arg2[%c5_22] : memref<8xf32, #tpu.memory_space<smem>>
    %95 = vector.broadcast %94 : f32 to vector<1x128xf32>
    %96 = arith.addf %93, %95 : vector<1x128xf32>
    %cst_23 = arith.constant 0.000000e+00 : f32
    %97 = vector.broadcast %cst_23 : f32 to vector<1x128xf32>
    %98 = arith.maximumf %96, %97 : vector<1x128xf32>
    %c5_24 = arith.constant 5 : index
    %99 = memref.load %arg3[%c5_24] : memref<8xf32, #tpu.memory_space<smem>>
    %100 = vector.broadcast %99 : f32 to vector<1x128xf32>
    %101 = arith.mulf %100, %98 : vector<1x128xf32>
    %102 = arith.addf %86, %101 : vector<1x128xf32>
    %c6 = arith.constant 6 : index
    %103 = memref.load %arg1[%c6] : memref<16xf32, #tpu.memory_space<smem>>
    %104 = vector.broadcast %103 : f32 to vector<1x128xf32>
    %105 = arith.mulf %104, %0 : vector<1x128xf32>
    %c14 = arith.constant 14 : index
    %106 = memref.load %arg1[%c14] : memref<16xf32, #tpu.memory_space<smem>>
    %107 = vector.broadcast %106 : f32 to vector<1x128xf32>
    %108 = arith.mulf %107, %1 : vector<1x128xf32>
    %109 = arith.addf %105, %108 : vector<1x128xf32>
    %c6_25 = arith.constant 6 : index
    %110 = memref.load %arg2[%c6_25] : memref<8xf32, #tpu.memory_space<smem>>
    %111 = vector.broadcast %110 : f32 to vector<1x128xf32>
    %112 = arith.addf %109, %111 : vector<1x128xf32>
    %cst_26 = arith.constant 0.000000e+00 : f32
    %113 = vector.broadcast %cst_26 : f32 to vector<1x128xf32>
    %114 = arith.maximumf %112, %113 : vector<1x128xf32>
    %c6_27 = arith.constant 6 : index
    %115 = memref.load %arg3[%c6_27] : memref<8xf32, #tpu.memory_space<smem>>
    %116 = vector.broadcast %115 : f32 to vector<1x128xf32>
    %117 = arith.mulf %116, %114 : vector<1x128xf32>
    %118 = arith.addf %102, %117 : vector<1x128xf32>
    %c7 = arith.constant 7 : index
    %119 = memref.load %arg1[%c7] : memref<16xf32, #tpu.memory_space<smem>>
    %120 = vector.broadcast %119 : f32 to vector<1x128xf32>
    %121 = arith.mulf %120, %0 : vector<1x128xf32>
    %c15 = arith.constant 15 : index
    %122 = memref.load %arg1[%c15] : memref<16xf32, #tpu.memory_space<smem>>
    %123 = vector.broadcast %122 : f32 to vector<1x128xf32>
    %124 = arith.mulf %123, %1 : vector<1x128xf32>
    %125 = arith.addf %121, %124 : vector<1x128xf32>
    %c7_28 = arith.constant 7 : index
    %126 = memref.load %arg2[%c7_28] : memref<8xf32, #tpu.memory_space<smem>>
    %127 = vector.broadcast %126 : f32 to vector<1x128xf32>
    %128 = arith.addf %125, %127 : vector<1x128xf32>
    %cst_29 = arith.constant 0.000000e+00 : f32
    %129 = vector.broadcast %cst_29 : f32 to vector<1x128xf32>
    %130 = arith.maximumf %128, %129 : vector<1x128xf32>
    %c7_30 = arith.constant 7 : index
    %131 = memref.load %arg3[%c7_30] : memref<8xf32, #tpu.memory_space<smem>>
    %132 = vector.broadcast %131 : f32 to vector<1x128xf32>
    %133 = arith.mulf %132, %130 : vector<1x128xf32>
    %134 = arith.addf %118, %133 : vector<1x128xf32>
    %135 = math.tanh %134 : vector<1x128xf32>
    %cst_31 = arith.constant 1.000000e+00 : f32
    %136 = vector.broadcast %cst_31 : f32 to vector<1x128xf32>
    %137 = arith.mulf %136, %2 : vector<1x128xf32>
    %138 = arith.addf %135, %137 : vector<1x128xf32>
    %c0_32 = arith.constant 0 : index
    %c0_33 = arith.constant 0 : index
    %139 = vector.load %arg7[%c0_32, %c0_33] : memref<1x128xf32, #tpu.memory_space<vmem>>, vector<1x128xf32>
    tpu.vector_store %arg7[%c0_32, %c0_33], %138 {strides = array<i32>} : memref<1x128xf32, #tpu.memory_space<vmem>>, vector<1x128xf32>,
    %140 = arith.mulf %2, %2 : vector<1x128xf32>
    %cst_34 = arith.constant -5.000000e-01 : f32
    %141 = vector.broadcast %cst_34 : f32 to vector<1x128xf32>
    %142 = arith.mulf %141, %140 : vector<1x128xf32>
    %cst_35 = arith.constant -0.918938517 : f32
    %143 = vector.broadcast %cst_35 : f32 to vector<1x128xf32>
    %144 = arith.addf %142, %143 : vector<1x128xf32>
    %c0_36 = arith.constant 0 : index
    %c0_37 = arith.constant 0 : index
    %145 = vector.load %arg8[%c0_36, %c0_37] : memref<1x128xf32, #tpu.memory_space<vmem>>, vector<1x128xf32>
    tpu.vector_store %arg8[%c0_36, %c0_37], %144 {strides = array<i32>} : memref<1x128xf32, #tpu.memory_space<vmem>>, vector<1x128xf32>,
    return
  }
  func.func @transform_0(%arg0: i32) -> i32 {
    %c0_i32 = arith.constant 0 : i32
    %c0_i32_0 = arith.constant 0 : i32
    return %c0_i32 : i32
  }
  func.func @transform_1(%arg0: i32) -> i32 {
    %c0_i32 = arith.constant 0 : i32
    %c0_i32_0 = arith.constant 0 : i32
    return %c0_i32 : i32
  }
  func.func @transform_2(%arg0: i32) -> i32 {
    %c0_i32 = arith.constant 0 : i32
    %c0_i32_0 = arith.constant 0 : i32
    return %c0_i32 : i32
  }
  func.func @transform_3(%arg0: i32) -> i32 {
    %c0_i32 = arith.constant 0 : i32
    %c0_i32_0 = arith.constant 0 : i32
    return %c0_i32 : i32
  }
  func.func @transform_4(%arg0: i32) -> (i32, i32) {
    %c0_i32 = arith.constant 0 : i32
    %c0_i32_0 = arith.constant 0 : i32
    return %c0_i32, %arg0 : i32, i32
  }
  func.func @transform_5(%arg0: i32) -> (i32, i32) {
    %c0_i32 = arith.constant 0 : i32
    %c0_i32_0 = arith.constant 0 : i32
    return %c0_i32, %arg0 : i32, i32
  }
  func.func @transform_6(%arg0: i32) -> (i32, i32) {
    %c0_i32 = arith.constant 0 : i32
    %c0_i32_0 = arith.constant 0 : i32
    return %c0_i32, %arg0 : i32, i32
  }
  func.func @transform_7(%arg0: i32) -> (i32, i32) {
    %c0_i32 = arith.constant 0 : i32
    %c0_i32_0 = arith.constant 0 : i32
    return %c0_i32, %arg0 : i32, i32
  }
}

</mosaic_0001>

<llo_original>
// kernel: tpu_custom_call.1
$region0: #{tpu_custom_call.1}
  #allocation0 [shape = 'u32[]', space=smem, size = 0x4, offset = 0x4, fixed_abs, tag = 'smem constant byte address 0x4 - core index']
  #allocation1 [shape = 'u32[144,128]{1,0:T(1,128)}', space=vmem, size = 0x12000, scoped, tag = 'internal scratch']
  #allocation2 [shape = 'f32[1]{0:T(128)S(6)}', space=smem, size = 0x200, scoped, tag = 'scoped memory for tpu_custom_call.1']
  %s0 = inlined_call_operand.vmem [shape: f32[16], index: 0, kind: input, shape index: {}]
  %s1 = inlined_call_operand.vmem [shape: f32[8], index: 1, kind: input, shape index: {}]
  %s2 = inlined_call_operand.vmem [shape: f32[8], index: 2, kind: input, shape index: {}]
  %s3 = inlined_call_operand.<no memory space> [shape: f32[1], index: 3, kind: input, shape index: {}]
  %s4 = inlined_call_operand.vmem [shape: f32[2,128], index: 4, kind: input, shape index: {}]
  %s5 = inlined_call_operand.vmem [shape: f32[1,128], index: 5, kind: input, shape index: {}]
  %s6 = inlined_call_operand.hbm [shape: f32[1,128], index: 6, kind: output, shape index: {0}]
  %s7 = inlined_call_operand.hbm [shape: f32[1,128], index: 7, kind: output, shape index: {1}]
  %8 = xla_tuple %s6, %s7
  %s9 = sld [smem:[#allocation0]]
  $region54: #{tpu_custom_call.1} parent=0
    _
  %s11 = ssub.s32 1, %s9
  %s12 = scalar_select 0, %s11, %s9
  %13 = sst [smem:[#allocation2]] %s3
  $region1: #{tpu_custom_call.1} parent=0
    #allocation3 [shape = 'u8[512]{0}', space=smem, size = 0x200, scoped, tag = 'input window, operand 0, single buffered']
    #allocation4 [shape = 's32[1]{0}', space=sflag, size = 0x4, scoped, tag = 'scoped memory for tpu_custom_call.1']
    #allocation5 [shape = 's32[1]{0}', space=sflag, size = 0x4, scoped, tag = 'scoped memory for tpu_custom_call.1']
    #allocation6 [shape = 'u8[512]{0}', space=smem, size = 0x200, scoped, tag = 'input window, operand 1, single buffered']
    #allocation7 [shape = 's32[1]{0}', space=sflag, size = 0x4, scoped, tag = 'scoped memory for tpu_custom_call.1']
    #allocation8 [shape = 'u8[512]{0}', space=smem, size = 0x200, scoped, tag = 'input window, operand 2, single buffered']
    #allocation9 [shape = 'u8[512]{0}', space=vmem, size = 0x400, scoped, tag = 'output window, operand 0, single buffered']
    #allocation10 [shape = 'u8[512]{0}', space=vmem, size = 0x400, scoped, tag = 'output window, operand 1, single buffered']
    #allocation11 [shape = 's32[1]{0}', space=sflag, size = 0x4, scoped, tag = 'scoped memory for tpu_custom_call.1']
    %14 = vsyncpa [#allocation5], 0
    %15 = vsyncpa [#allocation7], 0
    %16 = vsyncpa [#allocation4], 0
    %17 = vsyncpa [#allocation11], 0
    // Predicated region
    $region2: #{tpu_custom_call.1} parent=1 // pred_check
      _
    $region3: #{tpu_custom_call.1} parent=1 // pred_check_branch
      %19 = sbr.rel (0) target = $region5
    $region4: #{tpu_custom_call.1} parent=1 // pred_region
      %s21 = ssub.s32 16, 16
      %22 = vsyncadd [#allocation5], %s21
      %s24 = sshll.u32 %s0, 4
      %s25 = int_to_ptr.vmem [resolvable:$true] %s24
      %27 = dma.vmem_to_smem %s25, 16, [#allocation3], [#allocation5]
    $region5: #{tpu_custom_call.1} parent=1 // pred_fallthru
      _
    // Predicated region
    $region6: #{tpu_custom_call.1} parent=1 // pred_check
      _
    $region7: #{tpu_custom_call.1} parent=1 // pred_check_branch
      %29 = sbr.rel (0) target = $region9
    $region8: #{tpu_custom_call.1} parent=1 // pred_region
      %s31 = ssub.s32 16, 16
      %32 = vsyncadd [#allocation7], %s31
      %s34 = sshll.u32 %s1, 4
      %s35 = int_to_ptr.vmem [resolvable:$true] %s34
      %37 = dma.vmem_to_smem %s35, 16, [#allocation6], [#allocation7]
    $region9: #{tpu_custom_call.1} parent=1 // pred_fallthru
      _
    // Predicated region
    $region10: #{tpu_custom_call.1} parent=1 // pred_check
      _
    $region11: #{tpu_custom_call.1} parent=1 // pred_check_branch
      %39 = sbr.rel (0) target = $region13
    $region12: #{tpu_custom_call.1} parent=1 // pred_region
      %s41 = ssub.s32 16, 16
      %42 = vsyncadd [#allocation7], %s41
      %s44 = sshll.u32 %s2, 4
      %s45 = int_to_ptr.vmem [resolvable:$true] %s44
      %47 = dma.vmem_to_smem %s45, 16, [#allocation8], [#allocation7]
    $region13: #{tpu_custom_call.1} parent=1 // pred_fallthru
      _
    // Predicated region
    $region14: #{tpu_custom_call.1} parent=1 // pred_check
      _
    $region15: #{tpu_custom_call.1} parent=1 // pred_check_branch
      %49 = sbr.rel (0) target = $region17
    $region16: #{tpu_custom_call.1} parent=1 // pred_region
      _
    $region17: #{tpu_custom_call.1} parent=1 // pred_fallthru
      _
    // Predicated region
    $region18: #{tpu_custom_call.1} parent=1 // pred_check
      _
    $region19: #{tpu_custom_call.1} parent=1 // pred_check_branch
      %51 = sbr.rel (0) target = $region21
    $region20: #{tpu_custom_call.1} parent=1 // pred_region
      _
    $region21: #{tpu_custom_call.1} parent=1 // pred_fallthru
      _
    // Predicated region
    $region22: #{tpu_custom_call.1} parent=1 // pred_check
      _
    $region23: #{tpu_custom_call.1} parent=1 // pred_check_branch
      %53 = sbr.rel (0) target = $region25
    $region24: #{tpu_custom_call.1} parent=1 // pred_region
      _
    $region25: #{tpu_custom_call.1} parent=1 // pred_fallthru
      _
    // Predicated region
    $region26: #{tpu_custom_call.1} parent=1 // pred_check
      _
    $region27: #{tpu_custom_call.1} parent=1 // pred_check_branch
      %55 = sbr.rel (0) target = $region29
    $region28: #{tpu_custom_call.1} parent=1 // pred_region
      %56 = dma.done [#allocation5], 16
    $region29: #{tpu_custom_call.1} parent=1 // pred_fallthru
      _
    // Predicated region
    $region30: #{tpu_custom_call.1} parent=1 // pred_check
      _
    $region31: #{tpu_custom_call.1} parent=1 // pred_check_branch
      %58 = sbr.rel (0) target = $region33
    $region32: #{tpu_custom_call.1} parent=1 // pred_region
      %59 = dma.done [#allocation7], 16
    $region33: #{tpu_custom_call.1} parent=1 // pred_fallthru
      _
    // Predicated region
    $region34: #{tpu_custom_call.1} parent=1 // pred_check
      _
    $region35: #{tpu_custom_call.1} parent=1 // pred_check_branch
      %61 = sbr.rel (0) target = $region37
    $region36: #{tpu_custom_call.1} parent=1 // pred_region
      %62 = dma.done [#allocation7], 16
    $region37: #{tpu_custom_call.1} parent=1 // pred_fallthru
      _
    %63 = sfence
    %v64 = vld [vmem:[%s4] sm:$0x1]
    %v65 = vld [vmem:[%s4 + $0x1] sm:$0x1]
    %v66 = vld [vmem:[%s5] sm:$0x1]
    %s67 = sld [smem:[#allocation2]]
    %v68 = vstv %s67
    %v69 = vadd.f32 %v68, 0.0
    %s70 = sld [smem:[#allocation3]]
    %v71 = vstv %s70
    %v72 = vmul.f32 %v71, %v64
    %s73 = sld [smem:[#allocation3 + $0x8]]
    %v74 = vstv %s73
    %v75 = vmul.f32 %v74, %v65
    %v76 = vadd.f32 %v72, %v75
    %s77 = sld [smem:[#allocation6]]
    %v78 = vstv %s77
    %v79 = vadd.f32 %v76, %v78
    %v80 = vmax.f32 %v79, 0.0
    %s81 = sld [smem:[#allocation8]]
    %v82 = vstv %s81
    %v83 = vmul.f32 %v82, %v80
    %v84 = vadd.f32 %v69, %v83
    %s85 = sld [smem:[#allocation3 + $0x1]]
    %v86 = vstv %s85
    %v87 = vmul.f32 %v86, %v64
    %s88 = sld [smem:[#allocation3 + $0x9]]
    %v89 = vstv %s88
    %v90 = vmul.f32 %v89, %v65
    %v91 = vadd.f32 %v87, %v90
    %s92 = sld [smem:[#allocation6 + $0x1]]
    %v93 = vstv %s92
    %v94 = vadd.f32 %v91, %v93
    %v95 = vmax.f32 %v94, 0.0
    %s96 = sld [smem:[#allocation8 + $0x1]]
    %v97 = vstv %s96
    %v98 = vmul.f32 %v97, %v95
    %v99 = vadd.f32 %v84, %v98
    %s100 = sld [smem:[#allocation3 + $0x2]]
    %v101 = vstv %s100
    %v102 = vmul.f32 %v101, %v64
    %s103 = sld [smem:[#allocation3 + $0xa]]
    %v104 = vstv %s103
    %v105 = vmul.f32 %v104, %v65
    %v106 = vadd.f32 %v102, %v105
    %s107 = sld [smem:[#allocation6 + $0x2]]
    %v108 = vstv %s107
    %v109 = vadd.f32 %v106, %v108
    %v110 = vmax.f32 %v109, 0.0
    %s111 = sld [smem:[#allocation8 + $0x2]]
    %v112 = vstv %s111
    %v113 = vmul.f32 %v112, %v110
    %v114 = vadd.f32 %v99, %v113
    %s115 = sld [smem:[#allocation3 + $0x3]]
    %v116 = vstv %s115
    %v117 = vmul.f32 %v116, %v64
    %s118 = sld [smem:[#allocation3 + $0xb]]
    %v119 = vstv %s118
    %v120 = vmul.f32 %v119, %v65
    %v121 = vadd.f32 %v117, %v120
    %s122 = sld [smem:[#allocation6 + $0x3]]
    %v123 = vstv %s122
    %v124 = vadd.f32 %v121, %v123
    %v125 = vmax.f32 %v124, 0.0
    %s126 = sld [smem:[#allocation8 + $0x3]]
    %v127 = vstv %s126
    %v128 = vmul.f32 %v127, %v125
    %v129 = vadd.f32 %v114, %v128
    %s130 = sld [smem:[#allocation3 + $0x4]]
    %v131 = vstv %s130
    %v132 = vmul.f32 %v131, %v64
    %s133 = sld [smem:[#allocation3 + $0xc]]
    %v134 = vstv %s133
    %v135 = vmul.f32 %v134, %v65
    %v136 = vadd.f32 %v132, %v135
    %s137 = sld [smem:[#allocation6 + $0x4]]
    %v138 = vstv %s137
    %v139 = vadd.f32 %v136, %v138
    %v140 = vmax.f32 %v139, 0.0
    %s141 = sld [smem:[#allocation8 + $0x4]]
    %v142 = vstv %s141
    %v143 = vmul.f32 %v142, %v140
    %v144 = vadd.f32 %v129, %v143
    %s145 = sld [smem:[#allocation3 + $0x5]]
    %v146 = vstv %s145
    %v147 = vmul.f32 %v146, %v64
    %s148 = sld [smem:[#allocation3 + $0xd]]
    %v149 = vstv %s148
    %v150 = vmul.f32 %v149, %v65
    %v151 = vadd.f32 %v147, %v150
    %s152 = sld [smem:[#allocation6 + $0x5]]
    %v153 = vstv %s152
    %v154 = vadd.f32 %v151, %v153
    %v155 = vmax.f32 %v154, 0.0
    %s156 = sld [smem:[#allocation8 + $0x5]]
    %v157 = vstv %s156
    %v158 = vmul.f32 %v157, %v155
    %v159 = vadd.f32 %v144, %v158
    %s160 = sld [smem:[#allocation3 + $0x6]]
    %v161 = vstv %s160
    %v162 = vmul.f32 %v161, %v64
    %s163 = sld [smem:[#allocation3 + $0xe]]
    %v164 = vstv %s163
    %v165 = vmul.f32 %v164, %v65
    %v166 = vadd.f32 %v162, %v165
    %s167 = sld [smem:[#allocation6 + $0x6]]
    %v168 = vstv %s167
    %v169 = vadd.f32 %v166, %v168
    %v170 = vmax.f32 %v169, 0.0
    %s171 = sld [smem:[#allocation8 + $0x6]]
    %v172 = vstv %s171
    %v173 = vmul.f32 %v172, %v170
    %v174 = vadd.f32 %v159, %v173
    %s175 = sld [smem:[#allocation3 + $0x7]]
    %v176 = vstv %s175
    %v177 = vmul.f32 %v176, %v64
    %s178 = sld [smem:[#allocation3 + $0xf]]
    %v179 = vstv %s178
    %v180 = vmul.f32 %v179, %v65
    %v181 = vadd.f32 %v177, %v180
    %s182 = sld [smem:[#allocation6 + $0x7]]
    %v183 = vstv %s182
    %v184 = vadd.f32 %v181, %v183
    %v185 = vmax.f32 %v184, 0.0
    %s186 = sld [smem:[#allocation8 + $0x7]]
    %v187 = vstv %s186
    %v188 = vmul.f32 %v187, %v185
    %v189 = vadd.f32 %v174, %v188
    %v190 = vtanh.pop %v189
    %v191 = vadd.f32 %v190, %v66
    %192 = vst [vmem:[#allocation9] sm:$0x1] %v191
    %v193 = vmul.f32 %v66, %v66
    %v194 = vmul.f32 %v193, -0.5
    %v195 = vadd.f32 %v194, -0.9189385
    %196 = vst [vmem:[#allocation10] sm:$0x1] %v195
    // Predicated region
    $region38: #{tpu_custom_call.1} parent=1 // pred_check
      _
    $region39: #{tpu_custom_call.1} parent=1 // pred_check_branch
      %198 = sbr.rel (0) target = $region41
    $region40: #{tpu_custom_call.1} parent=1 // pred_region
      %s200 = ssub.s32 16, 16
      %201 = vsyncadd [#allocation4], %s200
      %s203 = sshll.u32 [#allocation9], 4
      %s204 = int_to_ptr.vmem [resolvable:$true] %s203
      %206 = dma.vmem_to_hbm [thread:$0]  %s204, 16, %s6, [#allocation4]
    $region41: #{tpu_custom_call.1} parent=1 // pred_fallthru
      _
    // Predicated region
    $region42: #{tpu_custom_call.1} parent=1 // pred_check
      _
    $region43: #{tpu_custom_call.1} parent=1 // pred_check_branch
      %208 = sbr.rel (0) target = $region45
    $region44: #{tpu_custom_call.1} parent=1 // pred_region
      %s210 = ssub.s32 16, 16
      %211 = vsyncadd [#allocation11], %s210
      %s213 = sshll.u32 [#allocation10], 4
      %s214 = int_to_ptr.vmem [resolvable:$true] %s213
      %216 = dma.vmem_to_hbm [thread:$0]  %s214, 16, %s7, [#allocation11]
    $region45: #{tpu_custom_call.1} parent=1 // pred_fallthru
      _
    // Predicated region
    $region46: #{tpu_custom_call.1} parent=1 // pred_check
      _
    $region47: #{tpu_custom_call.1} parent=1 // pred_check_branch
      %218 = sbr.rel (0) target = $region49
    $region48: #{tpu_custom_call.1} parent=1 // pred_region
      %219 = dma.done [#allocation4], 16
    $region49: #{tpu_custom_call.1} parent=1 // pred_fallthru
      _
    // Predicated region
    $region50: #{tpu_custom_call.1} parent=1 // pred_check
      _
    $region51: #{tpu_custom_call.1} parent=1 // pred_check_branch
      %221 = sbr.rel (0) target = $region53
    $region52: #{tpu_custom_call.1} parent=1 // pred_region
      %222 = dma.done [#allocation11], 16
    $region53: #{tpu_custom_call.1} parent=1 // pred_fallthru
      _
    %223 = vsyncpa [#allocation4], 1
    %224 = vsyncpa [#allocation11], 1
    %225 = vsyncpa [#allocation5], 1
    %226 = vsyncpa [#allocation7], 1

</llo_original>
